<compile_context>
chip_gen: v7x
topology: tpu7x:2x2x1
jax: 0.10.0
libtpu: 0.0.40
codegen_flags: <defaults>
</compile_context>

<pallas_src>
import functools

import jax
import jax.numpy as jnp
from jax.experimental import pallas as pl
from jax.experimental.pallas import tpu as pltpu

SMOOTHNESS = 1e-6
VMEM_LIMIT = 32 * 1024 * 1024   # safe on v5e/v6e (128 MiB VMEM) and v7x (64 MiB)


def _sigmoid(v):
    return 1.0 / (1.0 + jnp.exp(-v))


def _uncertainty_sum_kernel(x_ref, acc_ref, *, total_s, tile_s):
    # x_ref: (1, C, tile_s)   acc_ref: (1, C, 1) accumulated across the spatial axis.
    s = pl.program_id(1)

    @pl.when(s == 0)
    def _():
        acc_ref[...] = jnp.zeros_like(acc_ref)

    x = x_ref[...]
    sig = _sigmoid(x)
    u = -sig * jnp.log(sig + SMOOTHNESS)
    if total_s % tile_s != 0:  # ragged last spatial tile: mask the padded lanes
        col = jax.lax.broadcasted_iota(jnp.int32, u.shape, dimension=2) + s * tile_s
        u = jnp.where(col < total_s, u, 0.0)
    acc_ref[...] += jnp.sum(u, axis=-1, keepdims=True)


def _apply_attention_kernel(x_ref, w_ref, b_ref, o_ref):
    # x_ref: (1, C, tile_s)  w_ref: (1, C, 1)  b_ref: (1, 1)  o_ref: (1, C, tile_s)
    x = x_ref[0]                                                  # (C, tile_s)
    w = w_ref[0]                                                  # (C, 1)
    logit = jnp.sum(x * w, axis=0, keepdims=True) + b_ref[...]    # (1, tile_s)
    att = _sigmoid(logit)
    o_ref[0] = (x * att).astype(o_ref.dtype)                      # broadcast over C


def context_attention_pallas(x, conv_w, conv_b, num_selection_features,
                             *, tile_s_max=2048):
    """x: (B, C, H, W) f32; conv_w: (1, K, 1, 1); conv_b: (1,)."""
    B, C, H, W = x.shape
    K = num_selection_features
    assert K <= C
    S = H * W
    x_r = x.reshape(B, C, S)          # free view of contiguous NCHW; no transpose

    # Spatial (lane) tile: full-extent when it fits, otherwise a 128-multiple.
    tile_s = S if S <= tile_s_max else (tile_s_max // 128) * 128
    n_s = pl.cdiv(S, tile_s)

    # ---- pass 1: per-(b, c) spatial sum of -sigmoid(x)*log(sigmoid(x)+eps) ----
    usum = pl.pallas_call(
        functools.partial(_uncertainty_sum_kernel, total_s=S, tile_s=tile_s),
        out_shape=jax.ShapeDtypeStruct((B, C, 1), jnp.float32),
        grid_spec=pltpu.PrefetchScalarGridSpec(
            num_scalar_prefetch=0,
            grid=(B, n_s),
            in_specs=[pl.BlockSpec((1, C, tile_s), lambda b, s: (b, 0, s))],
            out_specs=pl.BlockSpec((1, C, 1), lambda b, s: (b, 0, 0)),
        ),
        compiler_params=pltpu.CompilerParams(
            dimension_semantics=("parallel", "arbitrary"),
            vmem_limit_bytes=VMEM_LIMIT,
        ),
    )(x_r)
    score = usum[:, :, 0] / float(S)                              # (B, C)

    # ---- tiny plain-JAX glue: smallest-K channels + scatter 1x1-conv weights ----
    # TODO(synk): top-k itself stays in plain JAX (O(B*C) scalars, no Pallas benefit).
    _, idx = jax.lax.top_k(-score, K)                             # K smallest, ascending
    w_vec = conv_w[0, :, 0, 0].astype(x.dtype)                    # (K,)
    w_full = jnp.zeros((B, C), x.dtype).at[
        jnp.arange(B)[:, None], idx].set(jnp.broadcast_to(w_vec, (B, K)))
    w_full_r = w_full[:, :, None]                                 # (B, C, 1)
    bias = conv_b.reshape(1, 1).astype(jnp.float32)

    # ---- pass 2: fused attention-map + elementwise scale (one x read + write) ----
    out_r = pl.pallas_call(
        _apply_attention_kernel,
        out_shape=jax.ShapeDtypeStruct((B, C, S), x.dtype),
        grid_spec=pltpu.PrefetchScalarGridSpec(
            num_scalar_prefetch=0,
            grid=(B, n_s),
            in_specs=[
                pl.BlockSpec((1, C, tile_s), lambda b, s: (b, 0, s)),
                pl.BlockSpec((1, C, 1), lambda b, s: (b, 0, 0)),
                pl.BlockSpec((1, 1), lambda b, s: (0, 0)),
            ],
            out_specs=pl.BlockSpec((1, C, tile_s), lambda b, s: (b, 0, s)),
        ),
        compiler_params=pltpu.CompilerParams(
            dimension_semantics=("parallel", "parallel"),
            vmem_limit_bytes=VMEM_LIMIT,
        ),
    )(x_r, w_full_r, bias)

    return out_r.reshape(B, C, H, W)


def context_attention_reference(x, conv_w, conv_b, num_selection_features):
    """Pure-JAX mirror of the PyTorch forward (sanity check)."""
    sig = _sigmoid(x)
    u = -sig * jnp.log(sig + SMOOTHNESS)
    score = jnp.mean(u, axis=(2, 3))                              # (B, C)
    _, idx = jax.lax.top_k(-score, num_selection_features)        # smallest K
    sel = jnp.take_along_axis(x, idx[:, :, None, None], axis=1)   # (B, K, H, W)
    logit = jnp.einsum("bkhw,k->bhw", sel, conv_w[0, :, 0, 0]) + conv_b[0]
    att = _sigmoid(logit)[:, None, :, :]
    return x * att


if __name__ == "__main__":
    key = jax.random.PRNGKey(0)
    kx, kw, kb = jax.random.split(key, 3)

    B, C, H, W = 2, 128, 16, 16
    K = 64   # num_selection_features (module default)

    x = jax.random.normal(kx, (B, C, H, W), jnp.float32)
    conv_w = jax.random.normal(kw, (1, K, 1, 1), jnp.float32) * (1.0 / K ** 0.5)
    conv_b = jax.random.normal(kb, (1,), jnp.float32) * 0.1

    out = context_attention_pallas(x, conv_w, conv_b, K)
    out = jax.block_until_ready(out)

    ref = context_attention_reference(x, conv_w, conv_b, K)
    assert out.shape == (B, C, H, W)
    err = float(jnp.max(jnp.abs(out - ref)))
    assert jnp.allclose(out, ref, atol=1e-4, rtol=1e-4), err

    print("KERNEL_OK")
</pallas_src>

<mosaic_0001>
module attributes {stable_mosaic.version = 11 : i64} {
  func.func @_uncertainty_sum_kernel(%arg0: i32, %arg1: i32, %arg2: memref<1x128x256xf32, #tpu.memory_space<vmem>>, %arg3: memref<1x128x1xf32, #tpu.memory_space<vmem>>) attributes {dimension_semantics = [#tpu.dimension_semantics<parallel>, #tpu.dimension_semantics<arbitrary>], iteration_bounds = array<i64: 2, 1>, scalar_prefetch = 0 : i64, scratch_operands = 0 : i64, tpu.core_type = #tpu.core_type<tc>, window_params = [{transform_indices = @transform_0, window_bounds = array<i64: 1, 128, 256>}, {transform_indices = @transform_1, window_bounds = array<i64: 1, 128, 1>}]} {
    %c0_i32 = arith.constant 0 : i32
    %0 = arith.cmpi eq, %arg1, %c0_i32 : i32
    %1 = arith.extui %0 : i1 to i32
    %c0_i32_0 = arith.constant 0 : i32
    %2 = arith.cmpi ne, %1, %c0_i32_0 : i32
    scf.if %2 {
      %cst_14 = arith.constant 0.000000e+00 : f32
      %22 = vector.broadcast %cst_14 : f32 to vector<1x128x1xf32>
      %c0_15 = arith.constant 0 : index
      %c0_16 = arith.constant 0 : index
      %c0_17 = arith.constant 0 : index
      %23 = vector.load %arg3[%c0_15, %c0_16, %c0_17] : memref<1x128x1xf32, #tpu.memory_space<vmem>>, vector<1x128x1xf32>
      tpu.vector_store %arg3[%c0_15, %c0_16, %c0_17], %22 {strides = array<i32>} : memref<1x128x1xf32, #tpu.memory_space<vmem>>, vector<1x128x1xf32>,
    } else {
    }
    %c0 = arith.constant 0 : index
    %c0_1 = arith.constant 0 : index
    %c0_2 = arith.constant 0 : index
    %3 = vector.load %arg2[%c0, %c0_1, %c0_2] : memref<1x128x256xf32, #tpu.memory_space<vmem>>, vector<1x128x256xf32>
    %cst = arith.constant 0.000000e+00 : f32
    %4 = vector.broadcast %cst : f32 to vector<1x128x256xf32>
    %5 = arith.subf %4, %3 : vector<1x128x256xf32>
    %6 = math.exp %5 : vector<1x128x256xf32>
    %cst_3 = arith.constant 1.000000e+00 : f32
    %7 = vector.broadcast %cst_3 : f32 to vector<1x128x256xf32>
    %8 = arith.addf %7, %6 : vector<1x128x256xf32>
    %cst_4 = arith.constant 1.000000e+00 : f32
    %9 = vector.broadcast %cst_4 : f32 to vector<1x128x256xf32>
    %10 = arith.divf %9, %8 : vector<1x128x256xf32>
    %cst_5 = arith.constant 0.000000e+00 : f32
    %11 = vector.broadcast %cst_5 : f32 to vector<1x128x256xf32>
    %12 = arith.subf %11, %10 : vector<1x128x256xf32>
    %cst_6 = arith.constant 9.99999997E-7 : f32
    %13 = vector.broadcast %cst_6 : f32 to vector<1x128x256xf32>
    %14 = arith.addf %10, %13 : vector<1x128x256xf32>
    %15 = math.log %14 : vector<1x128x256xf32>
    %16 = arith.mulf %12, %15 : vector<1x128x256xf32>
    %c0_7 = arith.constant 0 : index
    %c0_8 = arith.constant 0 : index
    %c0_9 = arith.constant 0 : index
    %17 = vector.load %arg3[%c0_7, %c0_8, %c0_9] : memref<1x128x1xf32, #tpu.memory_space<vmem>>, vector<1x128x1xf32>
    %cst_10 = arith.constant dense<0.000000e+00> : vector<1x128xf32>
    %18 = vector.multi_reduction <add>, %16, %cst_10 [2] : vector<1x128x256xf32> to vector<1x128xf32>
    %19 = vector.shape_cast %18 : vector<1x128xf32> to vector<1x128x1xf32>
    %20 = arith.addf %17, %19 : vector<1x128x1xf32>
    %c0_11 = arith.constant 0 : index
    %c0_12 = arith.constant 0 : index
    %c0_13 = arith.constant 0 : index
    %21 = vector.load %arg3[%c0_11, %c0_12, %c0_13] : memref<1x128x1xf32, #tpu.memory_space<vmem>>, vector<1x128x1xf32>
    tpu.vector_store %arg3[%c0_11, %c0_12, %c0_13], %20 {strides = array<i32>} : memref<1x128x1xf32, #tpu.memory_space<vmem>>, vector<1x128x1xf32>,
    return
  }
  func.func @transform_0(%arg0: i32, %arg1: i32) -> (i32, i32, i32) {
    %c0_i32 = arith.constant 0 : i32
    %c0_i32_0 = arith.constant 0 : i32
    return %arg0, %c0_i32, %arg1 : i32, i32, i32
  }
  func.func @transform_1(%arg0: i32, %arg1: i32) -> (i32, i32, i32) {
    %c0_i32 = arith.constant 0 : i32
    %c0_i32_0 = arith.constant 0 : i32
    %c0_i32_1 = arith.constant 0 : i32
    return %arg0, %c0_i32, %c0_i32_0 : i32, i32, i32
  }
}

</mosaic_0001>

<llo_original>
// kernel: tpu_custom_call.1
$region0: #{tpu_custom_call.1}
  #allocation0 [shape = 'u32[]', space=smem, size = 0x4, offset = 0x4, fixed_abs, tag = 'smem constant byte address 0x4 - core index']
  #allocation1 [shape = 'u32[144,128]{1,0:T(1,128)}', space=vmem, size = 0x12000, scoped, tag = 'internal scratch']
  %s0 = inlined_call_operand.hbm [shape: f32[2,128,256], index: 0, kind: input, shape index: {}]
  %s1 = inlined_call_operand.vmem [shape: f32[2,128,1], index: 1, kind: output, shape index: {}]
  %s2 = sld [smem:[#allocation0]]
  $region45: #{tpu_custom_call.1} parent=0
    _
  %s4 = ssub.s32 1, %s2
  %s5 = scalar_select 0, %s4, %s2
  $region1: #{tpu_custom_call.1} parent=0
    #allocation2 [shape = 'u8[262144]{0}', space=vmem, size = 0x40000, scoped, tag = 'input window, operand 0']
    #allocation3 [shape = 's32[2]{0}', space=sflag, size = 0x8, scoped, tag = 'scoped memory for tpu_custom_call.1']
    %6 = vsyncpa [#allocation3], 0
    %s7 = scalar_lea.sflag [#allocation3], 1
    %8 = vsyncpa %s7, 0
    loop: start=0, step=1, limit=4
    $region2: #{tpu_custom_call.1} parent=1 // loop_pre_header
      _
    $region3: #{tpu_custom_call.1} parent=1 // loop_header
      %s10 = sphi 0, %s14
      %p11 = scmp.ge.s32.totalorder %s10, 4
      %s17 = sphi 0, %s29
      %s18 = sphi 0, %s25
      %s19 = sphi 0, %s17
      %s20 = sphi 0, %s18
      %s21 = sphi 0, %s19
      %s22 = sphi 0, %s20
      %s34 = sphi 0, %s36
      %s37 = sphi 0, %s34
      %s38 = sphi 0, %s37
      %s54 = sphi 0, %s38
      %s60 = sphi 0, %s62
      %s63 = sphi 0, %s60
      %s64 = sphi 0, %s63
      %s80 = sphi 0, %s64
    $region4: #{tpu_custom_call.1} parent=1 // loop_header_branch
      %13 = sbr.rel (%p11) target = $region8
    $region5: #{tpu_custom_call.1} parent=1 // loop_body
      %s15 = ssub.s32 %s10, 1
      %s16 = ssub.s32 %s10, 2
      %s23 = sadd.s32 1, %s18
      %p24 = scmp.ge.s32.totalorder %s23, 1
      %s25 = scalar_select %p24, 0, %s23
      %s26 = sadd.s32 1, %s17
      %s27 = scalar_select %p24, %s26, %s17
      %p28 = scmp.ge.s32.totalorder %s27, 2
      %s29 = scalar_select %p28, 0, %s27
      %s30 = ssub.s32 %s17, %s29
      %s31 = ssub.s32 %s18, %s25
      %s32 = sor.u32 %s30, %s31
      %p33 = scmp.eq.s32.totalorder %s32, 0
      %s35 = sadd.s32 %s34, 1
      %s36 = scalar_select %p33, %s34, %s35
      %p39 = pneg %p33
      %p40 = scmp.eq.s32.totalorder %s10, 1
      %p41 = por %p39, %p40
      %p42 = scmp.ne.s32.totalorder %s34, %s37
      %p43 = scmp.eq.s32.totalorder %s10, 0
      %p44 = por %p42, %p43
      %p45 = scmp.ne.s32.totalorder %s34, %s37
      %p46 = scmp.eq.s32.totalorder %s15, 1
      %p47 = por %p45, %p46
      %p48 = scmp.ne.s32.totalorder %s37, %s38
      %p49 = scmp.eq.s32.totalorder %s15, 0
      %p50 = por %p48, %p49
      %p51 = scmp.ne.s32.totalorder %s37, %s38
      %p52 = scmp.eq.s32.totalorder %s16, 1
      %p53 = por %p51, %p52
      %p55 = scmp.ne.s32.totalorder %s38, %s54
      %p56 = scmp.eq.s32.totalorder %s16, 0
      %p57 = por %p55, %p56
      %s58 = ssub.s32 %s17, %s29
      %p59 = scmp.eq.s32.totalorder %s58, 0
      %s61 = sadd.s32 %s60, 1
      %s62 = scalar_select %p59, %s60, %s61
      %p65 = pneg %p59
      %p66 = scmp.eq.s32.totalorder %s10, 1
      %p67 = por %p65, %p66
      %p68 = scmp.ne.s32.totalorder %s60, %s63
      %p69 = scmp.eq.s32.totalorder %s10, 0
      %p70 = por %p68, %p69
      %p71 = scmp.ne.s32.totalorder %s60, %s63
      %p72 = scmp.eq.s32.totalorder %s15, 1
      %p73 = por %p71, %p72
      %p74 = scmp.ne.s32.totalorder %s63, %s64
      %p75 = scmp.eq.s32.totalorder %s15, 0
      %p76 = por %p74, %p75
      %p77 = scmp.ne.s32.totalorder %s63, %s64
      %p78 = scmp.eq.s32.totalorder %s16, 1
      %p79 = por %p77, %p78
      %p81 = scmp.ne.s32.totalorder %s64, %s80
      %p82 = scmp.eq.s32.totalorder %s16, 0
      %p83 = por %p81, %p82
      %p84 = scmp.le.s32.totalorder 1, %s10
      %p85 = scmp.lt.s32.totalorder %s10, 3
      %p86 = pnand %p84, %p85
      %p87 = pneg %p86
      // Predicated region
      $region9: #{tpu_custom_call.1} parent=5 // pred_check
        _
      $region10: #{tpu_custom_call.1} parent=5 // pred_check_branch
        %89 = sbr.rel (%p86) target = $region12
      $region11: #{tpu_custom_call.1} parent=5 // pred_region
        %s90 = ssub.s32 %s10, 1
      $region12: #{tpu_custom_call.1} parent=5 // pred_fallthru
        _
      %p91 = scmp.lt.s32.totalorder %s10, 2
      // Predicated region
      $region13: #{tpu_custom_call.1} parent=5 // pred_check
        %p92 = pneg %p91
      $region14: #{tpu_custom_call.1} parent=5 // pred_check_branch
        %94 = sbr.rel (%p92) target = $region16
      $region15: #{tpu_custom_call.1} parent=5 // pred_region
        // Predicated region
        $region17: #{tpu_custom_call.1} parent=15 // pred_check
          %p95 = pneg %p44
        $region18: #{tpu_custom_call.1} parent=15 // pred_check_branch
          %97 = sbr.rel (%p95) target = $region20
        $region19: #{tpu_custom_call.1} parent=15 // pred_region
          %s98 = sand.u32 %s34, 1
          %s99 = scalar_lea.sflag [#allocation3], %s98
          %s100 = sand.u32 %s34, 1
          %s101 = smul.addr %s100, 256
          %s102 = scalar_lea.vmem [#allocation2], %s101
          %s103 = smul.u32 2, %s18
          %s105 = ssub.s32 4096, 4096
          %106 = vsyncadd %s99, %s105
          %s107 = smul.addr %s17, 32
          %s108 = sadd.s32 %s103, %s107
          %s109 = smul.addr %s108, 128
          %s110 = scalar_lea.hbm %s0, %s109
          %s111 = sshll.u32 %s102, 4
          %s112 = int_to_ptr.vmem [resolvable:$true] %s111
          %117 = dma.hbm_to_vmem [thread:$0]  %s110, 4096, %s112, %s99, 256, 256, 16
        $region20: #{tpu_custom_call.1} parent=15 // pred_fallthru
          _
      $region16: #{tpu_custom_call.1} parent=5 // pred_fallthru
        _
      %p118 = scmp.le.s32.totalorder 1, %s10
      %p119 = scmp.lt.s32.totalorder %s10, 3
      %p120 = pnand %p118, %p119
      %p121 = pneg %p120
      // Predicated region
      $region21: #{tpu_custom_call.1} parent=5 // pred_check
        _
      $region22: #{tpu_custom_call.1} parent=5 // pred_check_branch
        %123 = sbr.rel (%p120) target = $region24
      $region23: #{tpu_custom_call.1} parent=5 // pred_region
        %s124 = ssub.s32 %s10, 1
        %s125 = sand.u32 %s37, 1
        %s126 = scalar_lea.sflag [#allocation3], %s125
        %s127 = sand.u32 %s37, 1
        %s128 = smul.addr %s127, 256
        %s129 = scalar_lea.vmem [#allocation2], %s128
        // Predicated region
        $region25: #{tpu_custom_call.1} parent=23 // pred_check
          %p130 = pneg %p50
        $region26: #{tpu_custom_call.1} parent=23 // pred_check_branch
          %132 = sbr.rel (%p130) target = $region28
        $region27: #{tpu_custom_call.1} parent=23 // pred_region
          %133 = dma.done %s126, 4096
        $region28: #{tpu_custom_call.1} parent=23 // pred_fallthru
          _
        %s134 = sand.u32 %s37, 1
        %s135 = scalar_lea.sflag [#allocation3], %s134
        %s136 = sand.u32 %s37, 1
        %s137 = smul.addr %s136, 256
        %s138 = scalar_lea.vmem [#allocation2], %s137
        %p139 = pneg %p50
        %p140 = pneg %p47
        %p141 = pneg %p76
        %p142 = pneg %p73
        %p143 = scmp.lt.s32.totalorder %s19, 1
        %s144 = scalar_select %p143, %s19, 1
        %s145 = smul.addr %s144, 16
        %s146 = smul.addr %s145, 8
        %s147 = scalar_lea.vmem %s1, %s146
        %s148 = smul.u32 2, %s20
        %p149 = scmp.lt.s32.totalorder %s19, 1
        %s150 = scalar_select %p149, %s19, 1
        %s151 = smul.addr %s150, 16
        %s152 = smul.addr %s151, 8
        %s153 = scalar_lea.vmem %s1, %s152
        %p154 = scmp.eq.s32.totalorder %s20, 0
        // Predicated region
        $region29: #{tpu_custom_call.1} parent=23 // pred_check
          %p155 = pneg %p154
        $region30: #{tpu_custom_call.1} parent=23 // pred_check_branch
          %157 = sbr.rel (%p155) target = $region32
        $region31: #{tpu_custom_call.1} parent=23 // pred_region
          %vm158 = vcmask 7168
          %159 = vst.msk [vmem:[%s153] sm:$0xff] %vm158, 0.0
          %160 = vst.msk [vmem:[%s153 + $0x8] sm:$0xff] %vm158, 0.0
          %161 = vst.msk [vmem:[%s153 + $0x10] sm:$0xff] %vm158, 0.0
          %162 = vst.msk [vmem:[%s153 + $0x18] sm:$0xff] %vm158, 0.0
          %163 = vst.msk [vmem:[%s153 + $0x20] sm:$0xff] %vm158, 0.0
          %164 = vst.msk [vmem:[%s153 + $0x28] sm:$0xff] %vm158, 0.0
          %165 = vst.msk [vmem:[%s153 + $0x30] sm:$0xff] %vm158, 0.0
          %166 = vst.msk [vmem:[%s153 + $0x38] sm:$0xff] %vm158, 0.0
          %167 = vst.msk [vmem:[%s153 + $0x40] sm:$0xff] %vm158, 0.0
          %168 = vst.msk [vmem:[%s153 + $0x48] sm:$0xff] %vm158, 0.0
          %169 = vst.msk [vmem:[%s153 + $0x50] sm:$0xff] %vm158, 0.0
          %170 = vst.msk [vmem:[%s153 + $0x58] sm:$0xff] %vm158, 0.0
          %171 = vst.msk [vmem:[%s153 + $0x60] sm:$0xff] %vm158, 0.0
          %172 = vst.msk [vmem:[%s153 + $0x68] sm:$0xff] %vm158, 0.0
          %173 = vst.msk [vmem:[%s153 + $0x70] sm:$0xff] %vm158, 0.0
          %174 = vst.msk [vmem:[%s153 + $0x78] sm:$0xff] %vm158, 0.0
        $region32: #{tpu_custom_call.1} parent=23 // pred_fallthru
          _
        %v175 = vld [vmem:[%s129] sm:$0xff]
        %v176 = vld [vmem:[%s129 + $0x8] sm:$0xff]
        %v177 = vld [vmem:[%s129 + $0x10] sm:$0xff]
        %v178 = vld [vmem:[%s129 + $0x18] sm:$0xff]
        %v179 = vld [vmem:[%s129 + $0x20] sm:$0xff]
        %v180 = vld [vmem:[%s129 + $0x28] sm:$0xff]
        %v181 = vld [vmem:[%s129 + $0x30] sm:$0xff]
        %v182 = vld [vmem:[%s129 + $0x38] sm:$0xff]
        %v183 = vld [vmem:[%s129 + $0x40] sm:$0xff]
        %v184 = vld [vmem:[%s129 + $0x48] sm:$0xff]
        %v185 = vld [vmem:[%s129 + $0x50] sm:$0xff]
        %v186 = vld [vmem:[%s129 + $0x58] sm:$0xff]
        %v187 = vld [vmem:[%s129 + $0x60] sm:$0xff]
        %v188 = vld [vmem:[%s129 + $0x68] sm:$0xff]
        %v189 = vld [vmem:[%s129 + $0x70] sm:$0xff]
        %v190 = vld [vmem:[%s129 + $0x78] sm:$0xff]
        %v191 = vld [vmem:[%s129 + $0x80] sm:$0xff]
        %v192 = vld [vmem:[%s129 + $0x88] sm:$0xff]
        %v193 = vld [vmem:[%s129 + $0x90] sm:$0xff]
        %v194 = vld [vmem:[%s129 + $0x98] sm:$0xff]
        %v195 = vld [vmem:[%s129 + $0xa0] sm:$0xff]
        %v196 = vld [vmem:[%s129 + $0xa8] sm:$0xff]
        %v197 = vld [vmem:[%s129 + $0xb0] sm:$0xff]
        %v198 = vld [vmem:[%s129 + $0xb8] sm:$0xff]
        %v199 = vld [vmem:[%s129 + $0xc0] sm:$0xff]
        %v200 = vld [vmem:[%s129 + $0xc8] sm:$0xff]
        %v201 = vld [vmem:[%s129 + $0xd0] sm:$0xff]
        %v202 = vld [vmem:[%s129 + $0xd8] sm:$0xff]
        %v203 = vld [vmem:[%s129 + $0xe0] sm:$0xff]
        %v204 = vld [vmem:[%s129 + $0xe8] sm:$0xff]
        %v205 = vld [vmem:[%s129 + $0xf0] sm:$0xff]
        %v206 = vld [vmem:[%s129 + $0xf8] sm:$0xff]
        %v207 = vsub.f32 0.0, %v175
        %v208 = vsub.f32 0.0, %v176
        %v209 = vsub.f32 0.0, %v177
        %v210 = vsub.f32 0.0, %v178
        %v211 = vsub.f32 0.0, %v179
        %v212 = vsub.f32 0.0, %v180
        %v213 = vsub.f32 0.0, %v181
        %v214 = vsub.f32 0.0, %v182
        %v215 = vsub.f32 0.0, %v183
        %v216 = vsub.f32 0.0, %v184
        %v217 = vsub.f32 0.0, %v185
        %v218 = vsub.f32 0.0, %v186
        %v219 = vsub.f32 0.0, %v187
        %v220 = vsub.f32 0.0, %v188
        %v221 = vsub.f32 0.0, %v189
        %v222 = vsub.f32 0.0, %v190
        %v223 = vsub.f32 0.0, %v191
        %v224 = vsub.f32 0.0, %v192
        %v225 = vsub.f32 0.0, %v193
        %v226 = vsub.f32 0.0, %v194
        %v227 = vsub.f32 0.0, %v195
        %v228 = vsub.f32 0.0, %v196
        %v229 = vsub.f32 0.0, %v197
        %v230 = vsub.f32 0.0, %v198
        %v231 = vsub.f32 0.0, %v199
        %v232 = vsub.f32 0.0, %v200
        %v233 = vsub.f32 0.0, %v201
        %v234 = vsub.f32 0.0, %v202
        %v235 = vsub.f32 0.0, %v203
        %v236 = vsub.f32 0.0, %v204
        %v237 = vsub.f32 0.0, %v205
        %v238 = vsub.f32 0.0, %v206
        %v239 = vmul.f32 %v207, 1.442695
        %v240 = vpow.pop %v239
        %v241 = vmul.f32 %v208, 1.442695
        %v242 = vpow.pop %v241
        %v243 = vmul.f32 %v209, 1.442695
        %v244 = vpow.pop %v243
        %v245 = vmul.f32 %v210, 1.442695
        %v246 = vpow.pop %v245
        %v247 = vmul.f32 %v211, 1.442695
        %v248 = vpow.pop %v247
        %v249 = vmul.f32 %v212, 1.442695
        %v250 = vpow.pop %v249
        %v251 = vmul.f32 %v213, 1.442695
        %v252 = vpow.pop %v251
        %v253 = vmul.f32 %v214, 1.442695
        %v254 = vpow.pop %v253
        %v255 = vmul.f32 %v215, 1.442695
        %v256 = vpow.pop %v255
        %v257 = vmul.f32 %v216, 1.442695
        %v258 = vpow.pop %v257
        %v259 = vmul.f32 %v217, 1.442695
        %v260 = vpow.pop %v259
        %v261 = vmul.f32 %v218, 1.442695
        %v262 = vpow.pop %v261
        %v263 = vmul.f32 %v219, 1.442695
        %v264 = vpow.pop %v263
        %v265 = vmul.f32 %v220, 1.442695
        %v266 = vpow.pop %v265
        %v267 = vmul.f32 %v221, 1.442695
        %v268 = vpow.pop %v267
        %v269 = vmul.f32 %v222, 1.442695
        %v270 = vpow.pop %v269
        %v271 = vmul.f32 %v223, 1.442695
        %v272 = vpow.pop %v271
        %v273 = vmul.f32 %v224, 1.442695
        %v274 = vpow.pop %v273
        %v275 = vmul.f32 %v225, 1.442695
        %v276 = vpow.pop %v275
        %v277 = vmul.f32 %v226, 1.442695
        %v278 = vpow.pop %v277
        %v279 = vmul.f32 %v227, 1.442695
        %v280 = vpow.pop %v279
        %v281 = vmul.f32 %v228, 1.442695
        %v282 = vpow.pop %v281
        %v283 = vmul.f32 %v229, 1.442695
        %v284 = vpow.pop %v283
        %v285 = vmul.f32 %v230, 1.442695
        %v286 = vpow.pop %v285
        %v287 = vmul.f32 %v231, 1.442695
        %v288 = vpow.pop %v287
        %v289 = vmul.f32 %v232, 1.442695
        %v290 = vpow.pop %v289
        %v291 = vmul.f32 %v233, 1.442695
        %v292 = vpow.pop %v291
        %v293 = vmul.f32 %v234, 1.442695
        %v294 = vpow.pop %v293
        %v295 = vmul.f32 %v235, 1.442695
        %v296 = vpow.pop %v295
        %v297 = vmul.f32 %v236, 1.442695
        %v298 = vpow.pop %v297
        %v299 = vmul.f32 %v237, 1.442695
        %v300 = vpow.pop %v299
        %v301 = vmul.f32 %v238, 1.442695
        %v302 = vpow.pop %v301
        %v303 = vadd.f32 %v240, 1.0
        %v304 = vadd.f32 %v242, 1.0
        %v305 = vadd.f32 %v244, 1.0
        %v306 = vadd.f32 %v246, 1.0
        %v307 = vadd.f32 %v248, 1.0
        %v308 = vadd.f32 %v250, 1.0
        %v309 = vadd.f32 %v252, 1.0
        %v310 = vadd.f32 %v254, 1.0
        %v311 = vadd.f32 %v256, 1.0
        %v312 = vadd.f32 %v258, 1.0
        %v313 = vadd.f32 %v260, 1.0
        %v314 = vadd.f32 %v262, 1.0
        %v315 = vadd.f32 %v264, 1.0
        %v316 = vadd.f32 %v266, 1.0
        %v317 = vadd.f32 %v268, 1.0
        %v318 = vadd.f32 %v270, 1.0
        %v319 = vadd.f32 %v272, 1.0
        %v320 = vadd.f32 %v274, 1.0
        %v321 = vadd.f32 %v276, 1.0
        %v322 = vadd.f32 %v278, 1.0
        %v323 = vadd.f32 %v280, 1.0
        %v324 = vadd.f32 %v282, 1.0
        %v325 = vadd.f32 %v284, 1.0
        %v326 = vadd.f32 %v286, 1.0
        %v327 = vadd.f32 %v288, 1.0
        %v328 = vadd.f32 %v290, 1.0
        %v329 = vadd.f32 %v292, 1.0
        %v330 = vadd.f32 %v294, 1.0
        %v331 = vadd.f32 %v296, 1.0
        %v332 = vadd.f32 %v298, 1.0
        %v333 = vadd.f32 %v300, 1.0
        %v334 = vadd.f32 %v302, 1.0
        %v335 = vrcp.pop %v303
        %v336 = vmul.f32 1.0, %v335
        %v337 = vrcp.pop %v304
        %v338 = vmul.f32 1.0, %v337
        %v339 = vrcp.pop %v305
        %v340 = vmul.f32 1.0, %v339
        %v341 = vrcp.pop %v306
        %v342 = vmul.f32 1.0, %v341
        %v343 = vrcp.pop %v307
        %v344 = vmul.f32 1.0, %v343
        %v345 = vrcp.pop %v308
        %v346 = vmul.f32 1.0, %v345
        %v347 = vrcp.pop %v309
        %v348 = vmul.f32 1.0, %v347
        %v349 = vrcp.pop %v310
        %v350 = vmul.f32 1.0, %v349
        %v351 = vrcp.pop %v311
        %v352 = vmul.f32 1.0, %v351
        %v353 = vrcp.pop %v312
        %v354 = vmul.f32 1.0, %v353
        %v355 = vrcp.pop %v313
        %v356 = vmul.f32 1.0, %v355
        %v357 = vrcp.pop %v314
        %v358 = vmul.f32 1.0, %v357
        %v359 = vrcp.pop %v315
        %v360 = vmul.f32 1.0, %v359
        %v361 = vrcp.pop %v316
        %v362 = vmul.f32 1.0, %v361
        %v363 = vrcp.pop %v317
        %v364 = vmul.f32 1.0, %v363
        %v365 = vrcp.pop %v318
        %v366 = vmul.f32 1.0, %v365
        %v367 = vrcp.pop %v319
        %v368 = vmul.f32 1.0, %v367
        %v369 = vrcp.pop %v320
        %v370 = vmul.f32 1.0, %v369
        %v371 = vrcp.pop %v321
        %v372 = vmul.f32 1.0, %v371
        %v373 = vrcp.pop %v322
        %v374 = vmul.f32 1.0, %v373
        %v375 = vrcp.pop %v323
        %v376 = vmul.f32 1.0, %v375
        %v377 = vrcp.pop %v324
        %v378 = vmul.f32 1.0, %v377
        %v379 = vrcp.pop %v325
        %v380 = vmul.f32 1.0, %v379
        %v381 = vrcp.pop %v326
        %v382 = vmul.f32 1.0, %v381
        %v383 = vrcp.pop %v327
        %v384 = vmul.f32 1.0, %v383
        %v385 = vrcp.pop %v328
        %v386 = vmul.f32 1.0, %v385
        %v387 = vrcp.pop %v329
        %v388 = vmul.f32 1.0, %v387
        %v389 = vrcp.pop %v330
        %v390 = vmul.f32 1.0, %v389
        %v391 = vrcp.pop %v331
        %v392 = vmul.f32 1.0, %v391
        %v393 = vrcp.pop %v332
        %v394 = vmul.f32 1.0, %v393
        %v395 = vrcp.pop %v333
        %v396 = vmul.f32 1.0, %v395
        %v397 = vrcp.pop %v334
        %v398 = vmul.f32 1.0, %v397
        %v399 = vsub.f32 0.0, %v336
        %v400 = vsub.f32 0.0, %v338
        %v401 = vsub.f32 0.0, %v340
        %v402 = vsub.f32 0.0, %v342
        %v403 = vsub.f32 0.0, %v344
        %v404 = vsub.f32 0.0, %v346
        %v405 = vsub.f32 0.0, %v348
        %v406 = vsub.f32 0.0, %v350
        %v407 = vsub.f32 0.0, %v352
        %v408 = vsub.f32 0.0, %v354
        %v409 = vsub.f32 0.0, %v356
        %v410 = vsub.f32 0.0, %v358
        %v411 = vsub.f32 0.0, %v360
        %v412 = vsub.f32 0.0, %v362
        %v413 = vsub.f32 0.0, %v364
        %v414 = vsub.f32 0.0, %v366
        %v415 = vsub.f32 0.0, %v368
        %v416 = vsub.f32 0.0, %v370
        %v417 = vsub.f32 0.0, %v372
        %v418 = vsub.f32 0.0, %v374
        %v419 = vsub.f32 0.0, %v376
        %v420 = vsub.f32 0.0, %v378
        %v421 = vsub.f32 0.0, %v380
        %v422 = vsub.f32 0.0, %v382
        %v423 = vsub.f32 0.0, %v384
        %v424 = vsub.f32 0.0, %v386
        %v425 = vsub.f32 0.0, %v388
        %v426 = vsub.f32 0.0, %v390
        %v427 = vsub.f32 0.0, %v392
        %v428 = vsub.f32 0.0, %v394
        %v429 = vsub.f32 0.0, %v396
        %v430 = vsub.f32 0.0, %v398
        %v431 = vadd.f32 %v336, 1e-06
        %v432 = vadd.f32 %v338, 1e-06
        %v433 = vadd.f32 %v340, 1e-06
        %v434 = vadd.f32 %v342, 1e-06
        %v435 = vadd.f32 %v344, 1e-06
        %v436 = vadd.f32 %v346, 1e-06
        %v437 = vadd.f32 %v348, 1e-06
        %v438 = vadd.f32 %v350, 1e-06
        %v439 = vadd.f32 %v352, 1e-06
        %v440 = vadd.f32 %v354, 1e-06
        %v441 = vadd.f32 %v356, 1e-06
        %v442 = vadd.f32 %v358, 1e-06
        %v443 = vadd.f32 %v360, 1e-06
        %v444 = vadd.f32 %v362, 1e-06
        %v445 = vadd.f32 %v364, 1e-06
        %v446 = vadd.f32 %v366, 1e-06
        %v447 = vadd.f32 %v368, 1e-06
        %v448 = vadd.f32 %v370, 1e-06
        %v449 = vadd.f32 %v372, 1e-06
        %v450 = vadd.f32 %v374, 1e-06
        %v451 = vadd.f32 %v376, 1e-06
        %v452 = vadd.f32 %v378, 1e-06
        %v453 = vadd.f32 %v380, 1e-06
        %v454 = vadd.f32 %v382, 1e-06
        %v455 = vadd.f32 %v384, 1e-06
        %v456 = vadd.f32 %v386, 1e-06
        %v457 = vadd.f32 %v388, 1e-06
        %v458 = vadd.f32 %v390, 1e-06
        %v459 = vadd.f32 %v392, 1e-06
        %v460 = vadd.f32 %v394, 1e-06
        %v461 = vadd.f32 %v396, 1e-06
        %v462 = vadd.f32 %v398, 1e-06
        %v463 = vlog2.pop %v431
        %v464 = vmul.f32 %v463, 0.6931472
        %v465 = vlog2.pop %v432
        %v466 = vmul.f32 %v465, 0.6931472
        %v467 = vlog2.pop %v433
        %v468 = vmul.f32 %v467, 0.6931472
        %v469 = vlog2.pop %v434
        %v470 = vmul.f32 %v469, 0.6931472
        %v471 = vlog2.pop %v435
        %v472 = vmul.f32 %v471, 0.6931472
        %v473 = vlog2.pop %v436
        %v474 = vmul.f32 %v473, 0.6931472
        %v475 = vlog2.pop %v437
        %v476 = vmul.f32 %v475, 0.6931472
        %v477 = vlog2.pop %v438
        %v478 = vmul.f32 %v477, 0.6931472
        %v479 = vlog2.pop %v439
        %v480 = vmul.f32 %v479, 0.6931472
        %v481 = vlog2.pop %v440
        %v482 = vmul.f32 %v481, 0.6931472
        %v483 = vlog2.pop %v441
        %v484 = vmul.f32 %v483, 0.6931472
        %v485 = vlog2.pop %v442
        %v486 = vmul.f32 %v485, 0.6931472
        %v487 = vlog2.pop %v443
        %v488 = vmul.f32 %v487, 0.6931472
        %v489 = vlog2.pop %v444
        %v490 = vmul.f32 %v489, 0.6931472
        %v491 = vlog2.pop %v445
        %v492 = vmul.f32 %v491, 0.6931472
        %v493 = vlog2.pop %v446
        %v494 = vmul.f32 %v493, 0.6931472
        %v495 = vlog2.pop %v447
        %v496 = vmul.f32 %v495, 0.6931472
        %v497 = vlog2.pop %v448
        %v498 = vmul.f32 %v497, 0.6931472
        %v499 = vlog2.pop %v449
        %v500 = vmul.f32 %v499, 0.6931472
        %v501 = vlog2.pop %v450
        %v502 = vmul.f32 %v501, 0.6931472
        %v503 = vlog2.pop %v451
        %v504 = vmul.f32 %v503, 0.6931472
        %v505 = vlog2.pop %v452
        %v506 = vmul.f32 %v505, 0.6931472
        %v507 = vlog2.pop %v453
        %v508 = vmul.f32 %v507, 0.6931472
        %v509 = vlog2.pop %v454
        %v510 = vmul.f32 %v509, 0.6931472
        %v511 = vlog2.pop %v455
        %v512 = vmul.f32 %v511, 0.6931472
        %v513 = vlog2.pop %v456
        %v514 = vmul.f32 %v513, 0.6931472
        %v515 = vlog2.pop %v457
        %v516 = vmul.f32 %v515, 0.6931472
        %v517 = vlog2.pop %v458
        %v518 = vmul.f32 %v517, 0.6931472
        %v519 = vlog2.pop %v459
        %v520 = vmul.f32 %v519, 0.6931472
        %v521 = vlog2.pop %v460
        %v522 = vmul.f32 %v521, 0.6931472
        %v523 = vlog2.pop %v461
        %v524 = vmul.f32 %v523, 0.6931472
        %v525 = vlog2.pop %v462
        %v526 = vmul.f32 %v525, 0.6931472
        %v527 = vmul.f32 %v399, %v464
        %v528 = vmul.f32 %v400, %v466
        %v529 = vmul.f32 %v401, %v468
        %v530 = vmul.f32 %v402, %v470
        %v531 = vmul.f32 %v403, %v472
        %v532 = vmul.f32 %v404, %v474
        %v533 = vmul.f32 %v405, %v476
        %v534 = vmul.f32 %v406, %v478
        %v535 = vmul.f32 %v407, %v480
        %v536 = vmul.f32 %v408, %v482
        %v537 = vmul.f32 %v409, %v484
        %v538 = vmul.f32 %v410, %v486
        %v539 = vmul.f32 %v411, %v488
        %v540 = vmul.f32 %v412, %v490
        %v541 = vmul.f32 %v413, %v492
        %v542 = vmul.f32 %v414, %v494
        %v543 = vmul.f32 %v415, %v496
        %v544 = vmul.f32 %v416, %v498
        %v545 = vmul.f32 %v417, %v500
        %v546 = vmul.f32 %v418, %v502
        %v547 = vmul.f32 %v419, %v504
        %v548 = vmul.f32 %v420, %v506
        %v549 = vmul.f32 %v421, %v508
        %v550 = vmul.f32 %v422, %v510
        %v551 = vmul.f32 %v423, %v512
        %v552 = vmul.f32 %v424, %v514
        %v553 = vmul.f32 %v425, %v516
        %v554 = vmul.f32 %v426, %v518
        %v555 = vmul.f32 %v427, %v520
        %v556 = vmul.f32 %v428, %v522
        %v557 = vmul.f32 %v429, %v524
        %v558 = vmul.f32 %v430, %v526
        %v559 = vld [vmem:[%s153] sm:$0xff]
        %v560 = vld [vmem:[%s153 + $0x8] sm:$0xff]
        %v561 = vld [vmem:[%s153 + $0x10] sm:$0xff]
        %v562 = vld [vmem:[%s153 + $0x18] sm:$0xff]
        %v563 = vld [vmem:[%s153 + $0x20] sm:$0xff]
        %v564 = vld [vmem:[%s153 + $0x28] sm:$0xff]
        %v565 = vld [vmem:[%s153 + $0x30] sm:$0xff]
        %v566 = vld [vmem:[%s153 + $0x38] sm:$0xff]
        %v567 = vld [vmem:[%s153 + $0x40] sm:$0xff]
        %v568 = vld [vmem:[%s153 + $0x48] sm:$0xff]
        %v569 = vld [vmem:[%s153 + $0x50] sm:$0xff]
        %v570 = vld [vmem:[%s153 + $0x58] sm:$0xff]
        %v571 = vld [vmem:[%s153 + $0x60] sm:$0xff]
        %v572 = vld [vmem:[%s153 + $0x68] sm:$0xff]
        %v573 = vld [vmem:[%s153 + $0x70] sm:$0xff]
        %v574 = vld [vmem:[%s153 + $0x78] sm:$0xff]
        %v575 = vadd.f32 %v527, %v528
        %576 = vadd.xlane.f32.xlu0 %v575
        %v577 = vpop.xlane.xlu0 %576
        %v578 = vadd.f32 %v529, %v530
        %579 = vadd.xlane.f32.xlu0 %v578
        %v580 = vpop.xlane.xlu0 %579
        %v581 = vadd.f32 %v531, %v532
        %582 = vadd.xlane.f32.xlu0 %v581
        %v583 = vpop.xlane.xlu0 %582
        %v584 = vadd.f32 %v533, %v534
        %585 = vadd.xlane.f32.xlu0 %v584
        %v586 = vpop.xlane.xlu0 %585
        %v587 = vadd.f32 %v535, %v536
        %588 = vadd.xlane.f32.xlu0 %v587
        %v589 = vpop.xlane.xlu0 %588
        %v590 = vadd.f32 %v537, %v538
        %591 = vadd.xlane.f32.xlu0 %v590
        %v592 = vpop.xlane.xlu0 %591
        %v593 = vadd.f32 %v539, %v540
        %594 = vadd.xlane.f32.xlu0 %v593
        %v595 = vpop.xlane.xlu0 %594
        %v596 = vadd.f32 %v541, %v542
        %597 = vadd.xlane.f32.xlu0 %v596
        %v598 = vpop.xlane.xlu0 %597
        %v599 = vadd.f32 %v543, %v544
        %600 = vadd.xlane.f32.xlu0 %v599
        %v601 = vpop.xlane.xlu0 %600
        %v602 = vadd.f32 %v545, %v546
        %603 = vadd.xlane.f32.xlu0 %v602
        %v604 = vpop.xlane.xlu0 %603
        %v605 = vadd.f32 %v547, %v548
        %606 = vadd.xlane.f32.xlu0 %v605
        %v607 = vpop.xlane.xlu0 %606
        %v608 = vadd.f32 %v549, %v550
        %609 = vadd.xlane.f32.xlu0 %v608
        %v610 = vpop.xlane.xlu0 %609
        %v611 = vadd.f32 %v551, %v552
        %612 = vadd.xlane.f32.xlu0 %v611
        %v613 = vpop.xlane.xlu0 %612
        %v614 = vadd.f32 %v553, %v554
        %615 = vadd.xlane.f32.xlu0 %v614
        %v616 = vpop.xlane.xlu0 %615
        %v617 = vadd.f32 %v555, %v556
        %618 = vadd.xlane.f32.xlu0 %v617
        %v619 = vpop.xlane.xlu0 %618
        %v620 = vadd.f32 %v557, %v558
        %621 = vadd.xlane.f32.xlu0 %v620
        %v622 = vpop.xlane.xlu0 %621
        %v623 = vadd.f32 %v559, %v577
        %v624 = vadd.f32 %v560, %v580
        %v625 = vadd.f32 %v561, %v583
        %v626 = vadd.f32 %v562, %v586
        %v627 = vadd.f32 %v563, %v589
        %v628 = vadd.f32 %v564, %v592
        %v629 = vadd.f32 %v565, %v595
        %v630 = vadd.f32 %v566, %v598
        %v631 = vadd.f32 %v567, %v601
        %v632 = vadd.f32 %v568, %v604
        %v633 = vadd.f32 %v569, %v607
        %v634 = vadd.f32 %v570, %v610
        %v635 = vadd.f32 %v571, %v613
        %v636 = vadd.f32 %v572, %v616
        %v637 = vadd.f32 %v573, %v619
        %v638 = vadd.f32 %v574, %v622
        %vm639 = vcmask 7168
        %640 = vst.msk [vmem:[%s153] sm:$0xff] %vm639, %v623
        %641 = vst.msk [vmem:[%s153 + $0x8] sm:$0xff] %vm639, %v624
        %642 = vst.msk [vmem:[%s153 + $0x10] sm:$0xff] %vm639, %v625
        %643 = vst.msk [vmem:[%s153 + $0x18] sm:$0xff] %vm639, %v626
        %644 = vst.msk [vmem:[%s153 + $0x20] sm:$0xff] %vm639, %v627
        %645 = vst.msk [vmem:[%s153 + $0x28] sm:$0xff] %vm639, %v628
        %646 = vst.msk [vmem:[%s153 + $0x30] sm:$0xff] %vm639, %v629
        %647 = vst.msk [vmem:[%s153 + $0x38] sm:$0xff] %vm639, %v630
        %648 = vst.msk [vmem:[%s153 + $0x40] sm:$0xff] %vm639, %v631
        %649 = vst.msk [vmem:[%s153 + $0x48] sm:$0xff] %vm639, %v632
        %650 = vst.msk [vmem:[%s153 + $0x50] sm:$0xff] %vm639, %v633
        %651 = vst.msk [vmem:[%s153 + $0x58] sm:$0xff] %vm639, %v634
        %652 = vst.msk [vmem:[%s153 + $0x60] sm:$0xff] %vm639, %v635
        %653 = vst.msk [vmem:[%s153 + $0x68] sm:$0xff] %vm639, %v636
        %654 = vst.msk [vmem:[%s153 + $0x70] sm:$0xff] %vm639, %v637
        %655 = vst.msk [vmem:[%s153 + $0x78] sm:$0xff] %vm639, %v638
        %p656 = scmp.lt.s32.totalorder %s19, 1
        %s657 = scalar_select %p656, %s19, 1
        %s658 = smul.addr %s657, 16
        %s659 = smul.addr %s658, 8
        %s660 = scalar_lea.vmem %s1, %s659
        // Predicated region
        $region33: #{tpu_custom_call.1} parent=23 // pred_check
          %p661 = pneg %p73
        $region34: #{tpu_custom_call.1} parent=23 // pred_check_branch
          %663 = sbr.rel (%p661) target = $region36
        $region35: #{tpu_custom_call.1} parent=23 // pred_region
          _
        $region36: #{tpu_custom_call.1} parent=23 // pred_fallthru
          _
      $region24: #{tpu_custom_call.1} parent=5 // pred_fallthru
        _
      %p664 = scmp.le.s32.totalorder 2, %s10
      // Predicated region
      $region37: #{tpu_custom_call.1} parent=5 // pred_check
        %p665 = pneg %p664
      $region38: #{tpu_custom_call.1} parent=5 // pred_check_branch
        %667 = sbr.rel (%p665) target = $region40
      $region39: #{tpu_custom_call.1} parent=5 // pred_region
        %s668 = ssub.s32 %s10, 2
        // Predicated region
        $region41: #{tpu_custom_call.1} parent=39 // pred_check
          %p669 = pneg %p79
        $region42: #{tpu_custom_call.1} parent=39 // pred_check_branch
          %671 = sbr.rel (%p669) target = $region44
        $region43: #{tpu_custom_call.1} parent=39 // pred_region
          %p672 = scmp.lt.s32.totalorder %s21, 1
          %s673 = scalar_select %p672, %s21, 1
          %s674 = smul.addr %s673, 16
          %s675 = smul.addr %s674, 8
          %s676 = scalar_lea.vmem %s1, %s675
        $region44: #{tpu_custom_call.1} parent=39 // pred_fallthru
          _
      $region40: #{tpu_custom_call.1} parent=5 // pred_fallthru
        _
    $region6: #{tpu_custom_call.1} parent=1 // loop_footer
      %s14 = sadd.s32 1, %s10
    $region7: #{tpu_custom_call.1} parent=1 // loop_footer_branch
      %9 = sbr.rel target = $region3
    $region8: #{tpu_custom_call.1} parent=1 // loop_exit
      _
    %677 = vsyncpa [#allocation3], 1
    %s678 = scalar_lea.sflag [#allocation3], 1
    %679 = vsyncpa %s678, 1

</llo_original>
